<compile_context>
chip_gen: v6e
topology: v6e:2x2x1
jax: 0.10.0
libtpu: 0.0.40
codegen_flags: <defaults>
</compile_context>

<pallas_src>
import functools

import jax
import jax.numpy as jnp
from jax import lax
from jax.experimental import pallas as pl
from jax.experimental.pallas import tpu as pltpu

LANE = 128
TARGET_TILE_BYTES = 4 * 1024 * 1024     # ~4 MiB per input tile
VMEM_LIMIT_BYTES = 40 * 1024 * 1024     # 2 inputs x 2 buffers x 4 MiB + slack


def _cdiv(a, b):
    return (a + b - 1) // b


def _num_tensorcores():
    """Best-effort TensorCores-per-chip (megacore grid split). Safe default 1."""
    try:
        kind = jax.devices()[0].device_kind.lower()
    except Exception:
        return 1
    return 2 if any(t in kind for t in ("v7", "7x", "v4", "v5p")) else 1


def _charbonnier_kernel(x_ref, y_ref, o_ref, *, alpha, eps, steps, br,
                        full_rows, tail_lane, full_blocks, need_mask):
    p = pl.program_id(0)
    k = pl.program_id(1)

    @pl.when(k == 0)
    def _():
        o_ref[...] = jnp.zeros_like(o_ref)

    d = x_ref[...].astype(jnp.float32) - y_ref[...].astype(jnp.float32)
    s = d * d + jnp.float32(eps)
    if alpha == 2:
        term = jnp.sqrt(s)                              # 1 EUP op / element
    else:
        term = jnp.power(s, jnp.float32(1.0 / alpha))   # generic path

    rows_blk, lane = term.shape
    acc_rows = o_ref.shape[0]

    def fold(t):
        # Major-axis reduction into the (acc_rows, 128) accumulator:
        # pure elementwise vreg adds, no XLU; acc_rows/8 independent chains.
        return jnp.sum(t.reshape(rows_blk // acc_rows, acc_rows, lane), axis=0)

    if need_mask:
        # Logical flat block index (UNCLAMPED — the index_map clamp only picks
        # which data is DMA'd; the mask below zeroes any overshoot entirely).
        b = p * steps + k

        @pl.when(b < full_blocks)            # hot path: every element valid
        def _():
            o_ref[...] += fold(term)

        @pl.when(b >= full_blocks)           # cold path: mask the ragged tail
        def _():
            row_ids = lax.broadcasted_iota(jnp.int32, (rows_blk, lane), 0)
            col_ids = lax.broadcasted_iota(jnp.int32, (rows_blk, lane), 1)
            grow = b * br + row_ids          # global row index of the element
            valid = (grow < full_rows) | ((grow == full_rows)
                                          & (col_ids < tail_lane))
            # jnp.where selects 0.0 even if `term` holds garbage/NaN there.
            o_ref[...] += fold(jnp.where(valid, term, jnp.float32(0.0)))
    else:
        o_ref[...] += fold(term)


def charbonnier_loss(x, y, alpha=2, eps=1e-6):
    """x, y: NCHW arrays of identical shape. Returns scalar f32 loss."""
    assert x.shape == y.shape
    n = x.shape[0]
    total = 1
    for s in x.shape:
        total *= s
    assert total > 0

    itemsize = jnp.dtype(x.dtype).itemsize

    # --- lane-dense slab geometry (all static Python ints) -------------------
    pad_lane = (-total) % LANE      # only so the (rows, 128) reshape is legal
    total_p = total + pad_lane
    rows = total_p // LANE
    full_rows = total // LANE       # rows whose 128 lanes are all valid
    tail_lane = total % LANE        # valid lanes in row `full_rows` (0 => none)

    xf = x.reshape(-1)
    yf = y.reshape(-1)
    if pad_lane:
        # Rare (numel not a multiple of 128); padded values are masked
        # in-kernel so their contents are irrelevant.
        xf = jnp.pad(xf, (0, pad_lane))
        yf = jnp.pad(yf, (0, pad_lane))
    xf = xf.reshape(rows, LANE)
    yf = yf.reshape(rows, LANE)

    # --- tiling ---------------------------------------------------------------
    if rows < 8:
        # Tiny input: single block equal to the full array dims.
        num_splits = 1
        br = rows
        acc_rows = rows
        steps = 1
    else:
        num_splits = _num_tensorcores()
        max_rows = max(8, (TARGET_TILE_BYTES // (LANE * itemsize)) // 8 * 8)
        rows_per_split = _cdiv(rows, num_splits)
        br = max(8, min(max_rows, (rows_per_split // 8) * 8))   # multiple of 8
        acc_rows = 64 if br % 64 == 0 else 8
        steps = _cdiv(_cdiv(rows, br), num_splits)

    nblocks = _cdiv(rows, br)
    last_block = nblocks - 1
    full_blocks = total // (br * LANE)        # blocks with every element valid
    need_mask = full_blocks < num_splits * steps

    kernel = functools.partial(
        _charbonnier_kernel, alpha=alpha, eps=eps, steps=steps, br=br,
        full_rows=full_rows, tail_lane=tail_lane,
        full_blocks=full_blocks, need_mask=need_mask)

    def in_idx(p, k):
        # Clamp so fully-overshooting blocks (possible when nblocks % num_splits
        # != 0) still DMA a valid window; their contribution is masked to zero.
        return (jnp.minimum(p * steps + k, last_block), 0)

    cost = pl.CostEstimate(
        flops=5 * total_p,
        transcendentals=total_p,
        bytes_accessed=(xf.size + yf.size) * itemsize
        + num_splits * acc_rows * LANE * 4,
    )

    partials = pl.pallas_call(
        kernel,
        out_shape=jax.ShapeDtypeStruct((num_splits * acc_rows, LANE),
                                       jnp.float32),
        grid_spec=pltpu.PrefetchScalarGridSpec(
            num_scalar_prefetch=0,
            grid=(num_splits, steps),
            in_specs=[
                pl.BlockSpec((br, LANE), in_idx),
                pl.BlockSpec((br, LANE), in_idx),
            ],
            out_specs=pl.BlockSpec((acc_rows, LANE), lambda p, k: (p, 0)),
        ),
        compiler_params=pltpu.CompilerParams(
            dimension_semantics=("parallel", "arbitrary"),
            vmem_limit_bytes=VMEM_LIMIT_BYTES,
        ),
        cost_estimate=cost,
    )(xf, yf)

    return jnp.sum(partials) / jnp.float32(n)


def charbonnier_loss_ref(x, y, alpha=2, eps=1e-6):
    d = x.astype(jnp.float32) - y.astype(jnp.float32)
    return jnp.mean(jnp.sum(jnp.power(d * d + eps, 1.0 / alpha), axis=(1, 2, 3)))


if __name__ == "__main__":
    key = jax.random.PRNGKey(0)
    kx, ky = jax.random.split(key)
    shape = (2, 4, 16, 16)  # NCHW
    x = jax.random.normal(kx, shape, dtype=jnp.float32)
    y = jax.random.normal(ky, shape, dtype=jnp.float32)

    out = charbonnier_loss(x, y, alpha=2, eps=1e-6)
    out = jax.block_until_ready(out)

    ref = charbonnier_loss_ref(x, y, alpha=2, eps=1e-6)
    assert jnp.allclose(out, ref, rtol=1e-5, atol=1e-5), (out, ref)
    print("KERNEL_OK")
</pallas_src>

<mosaic_0001>
module attributes {stable_mosaic.version = 11 : i64} {
  func.func @_charbonnier_kernel(%arg0: i32, %arg1: i32, %arg2: memref<16x128xf32, #tpu.memory_space<vmem>>, %arg3: memref<16x128xf32, #tpu.memory_space<vmem>>, %arg4: memref<8x128xf32, #tpu.memory_space<vmem>>) attributes {dimension_semantics = [#tpu.dimension_semantics<parallel>, #tpu.dimension_semantics<arbitrary>], iteration_bounds = array<i64: 1, 1>, scalar_prefetch = 0 : i64, scratch_operands = 0 : i64, tpu.core_type = #tpu.core_type<tc>, window_params = [{transform_indices = @transform_0, window_bounds = array<i64: 16, 128>}, {transform_indices = @transform_1, window_bounds = array<i64: 16, 128>}, {transform_indices = @transform_2, window_bounds = array<i64: 8, 128>}]} {
    %c0_i32 = arith.constant 0 : i32
    %0 = arith.cmpi eq, %arg1, %c0_i32 : i32
    %1 = arith.extui %0 : i1 to i32
    %c0_i32_0 = arith.constant 0 : i32
    %2 = arith.cmpi ne, %1, %c0_i32_0 : i32
    scf.if %2 {
      %cst_9 = arith.constant 0.000000e+00 : f32
      %15 = vector.broadcast %cst_9 : f32 to vector<8x128xf32>
      %c0_10 = arith.constant 0 : index
      %c0_11 = arith.constant 0 : index
      %16 = vector.load %arg4[%c0_10, %c0_11] : memref<8x128xf32, #tpu.memory_space<vmem>>, vector<8x128xf32>
      tpu.vector_store %arg4[%c0_10, %c0_11], %15 {strides = array<i32>} : memref<8x128xf32, #tpu.memory_space<vmem>>, vector<8x128xf32>,
    } else {
    }
    %c0 = arith.constant 0 : index
    %c0_1 = arith.constant 0 : index
    %3 = vector.load %arg2[%c0, %c0_1] : memref<16x128xf32, #tpu.memory_space<vmem>>, vector<16x128xf32>
    %c0_2 = arith.constant 0 : index
    %c0_3 = arith.constant 0 : index
    %4 = vector.load %arg3[%c0_2, %c0_3] : memref<16x128xf32, #tpu.memory_space<vmem>>, vector<16x128xf32>
    %5 = arith.subf %3, %4 : vector<16x128xf32>
    %6 = arith.mulf %5, %5 : vector<16x128xf32>
    %cst = arith.constant 9.99999997E-7 : f32
    %7 = vector.broadcast %cst : f32 to vector<16x128xf32>
    %8 = arith.addf %6, %7 : vector<16x128xf32>
    %9 = math.sqrt %8 : vector<16x128xf32>
    %c0_4 = arith.constant 0 : index
    %c0_5 = arith.constant 0 : index
    %10 = vector.load %arg4[%c0_4, %c0_5] : memref<8x128xf32, #tpu.memory_space<vmem>>, vector<8x128xf32>
    %11 = vector.shape_cast %9 : vector<16x128xf32> to vector<2x8x128xf32>
    %cst_6 = arith.constant dense<0.000000e+00> : vector<8x128xf32>
    %12 = vector.multi_reduction <add>, %11, %cst_6 [0] : vector<2x8x128xf32> to vector<8x128xf32>
    %13 = arith.addf %10, %12 : vector<8x128xf32>
    %c0_7 = arith.constant 0 : index
    %c0_8 = arith.constant 0 : index
    %14 = vector.load %arg4[%c0_7, %c0_8] : memref<8x128xf32, #tpu.memory_space<vmem>>, vector<8x128xf32>
    tpu.vector_store %arg4[%c0_7, %c0_8], %13 {strides = array<i32>} : memref<8x128xf32, #tpu.memory_space<vmem>>, vector<8x128xf32>,
    return
  }
  func.func @transform_0(%arg0: i32, %arg1: i32) -> (i32, i32) {
    %c1_i32 = arith.constant 1 : i32
    %0 = arith.muli %arg0, %c1_i32 : i32
    %1 = arith.addi %0, %arg1 : i32
    %c0_i32 = arith.constant 0 : i32
    %2 = arith.minsi %1, %c0_i32 : i32
    %c0_i32_0 = arith.constant 0 : i32
    %c0_i32_1 = arith.constant 0 : i32
    return %2, %c0_i32_0 : i32, i32
  }
  func.func @transform_1(%arg0: i32, %arg1: i32) -> (i32, i32) {
    %c1_i32 = arith.constant 1 : i32
    %0 = arith.muli %arg0, %c1_i32 : i32
    %1 = arith.addi %0, %arg1 : i32
    %c0_i32 = arith.constant 0 : i32
    %2 = arith.minsi %1, %c0_i32 : i32
    %c0_i32_0 = arith.constant 0 : i32
    %c0_i32_1 = arith.constant 0 : i32
    return %2, %c0_i32_0 : i32, i32
  }
  func.func @transform_2(%arg0: i32, %arg1: i32) -> (i32, i32) {
    %c0_i32 = arith.constant 0 : i32
    %c0_i32_0 = arith.constant 0 : i32
    return %arg0, %c0_i32 : i32, i32
  }
}

</mosaic_0001>

<llo_original>
// kernel: tpu_custom_call.1
$region0: #{tpu_custom_call.1}
  #allocation0 [shape = 'u32[]', space=smem, size = 0x4, offset = 0x4, fixed_abs, tag = 'smem constant byte address 0x4 - core index']
  #allocation1 [shape = 'u32[144,128]{1,0:T(1,128)}', space=vmem, size = 0x12000, scoped, tag = 'internal scratch']
  %s0 = inlined_call_operand.hbm [shape: f32[16,128], index: 0, kind: input, shape index: {}]
  %s1 = inlined_call_operand.hbm [shape: f32[16,128], index: 1, kind: input, shape index: {}]
  %s2 = inlined_call_operand.hbm [shape: f32[8,128], index: 2, kind: output, shape index: {}]
  %s3 = sld [smem:[#allocation0]]
  $region30: #{tpu_custom_call.1} parent=0
    _
  %s5 = ssub.s32 1, %s3
  %s6 = scalar_select 0, %s5, %s3
  $region1: #{tpu_custom_call.1} parent=0
    #allocation2 [shape = 'u8[8192]{0}', space=vmem, size = 0x2000, scoped, tag = 'input window, operand 0, single buffered']
    #allocation3 [shape = 's32[1]{0}', space=sflag, size = 0x4, scoped, tag = 'scoped memory for tpu_custom_call.1']
    #allocation4 [shape = 's32[1]{0}', space=sflag, size = 0x4, scoped, tag = 'scoped memory for tpu_custom_call.1']
    #allocation5 [shape = 'u8[8192]{0}', space=vmem, size = 0x2000, scoped, tag = 'input window, operand 1, single buffered']
    #allocation6 [shape = 's32[1]{0}', space=sflag, size = 0x4, scoped, tag = 'scoped memory for tpu_custom_call.1']
    #allocation7 [shape = 'u8[4096]{0}', space=vmem, size = 0x1000, scoped, tag = 'output window, operand 0, single buffered']
    %7 = vsyncpa [#allocation3], 0
    %8 = vsyncpa [#allocation6], 0
    %9 = vsyncpa [#allocation4], 0
    // Predicated region
    $region2: #{tpu_custom_call.1} parent=1 // pred_check
      _
    $region3: #{tpu_custom_call.1} parent=1 // pred_check_branch
      %11 = sbr.rel (0) target = $region5
    $region4: #{tpu_custom_call.1} parent=1 // pred_region
      %s12 = sadd.s32 0, 0
      %p13 = scmp.lt.s32.totalorder %s12, 0
      %s14 = scalar_select %p13, %s12, 0
      %s15 = smul.u32 2, %s14
      %s17 = ssub.s32 256, 256
      %18 = vsyncadd [#allocation3], %s17
      %s19 = smul.addr %s15, 128
      %s20 = scalar_lea.hbm %s0, %s19
      %s21 = sshll.u32 [#allocation2], 4
      %s22 = int_to_ptr.vmem [resolvable:$true] %s21
      %27 = dma.hbm_to_vmem [thread:$0]  %s20, 256, %s22, [#allocation3], 128, 128, 8
    $region5: #{tpu_custom_call.1} parent=1 // pred_fallthru
      _
    // Predicated region
    $region6: #{tpu_custom_call.1} parent=1 // pred_check
      _
    $region7: #{tpu_custom_call.1} parent=1 // pred_check_branch
      %29 = sbr.rel (0) target = $region9
    $region8: #{tpu_custom_call.1} parent=1 // pred_region
      %s30 = sadd.s32 0, 0
      %p31 = scmp.lt.s32.totalorder %s30, 0
      %s32 = scalar_select %p31, %s30, 0
      %s33 = smul.u32 2, %s32
      %s35 = ssub.s32 256, 256
      %36 = vsyncadd [#allocation6], %s35
      %s37 = smul.addr %s33, 128
      %s38 = scalar_lea.hbm %s1, %s37
      %s39 = sshll.u32 [#allocation5], 4
      %s40 = int_to_ptr.vmem [resolvable:$true] %s39
      %45 = dma.hbm_to_vmem [thread:$0]  %s38, 256, %s40, [#allocation6], 128, 128, 8
    $region9: #{tpu_custom_call.1} parent=1 // pred_fallthru
      _
    // Predicated region
    $region10: #{tpu_custom_call.1} parent=1 // pred_check
      _
    $region11: #{tpu_custom_call.1} parent=1 // pred_check_branch
      %47 = sbr.rel (0) target = $region13
    $region12: #{tpu_custom_call.1} parent=1 // pred_region
      %48 = dma.done [#allocation3], 256
    $region13: #{tpu_custom_call.1} parent=1 // pred_fallthru
      _
    // Predicated region
    $region14: #{tpu_custom_call.1} parent=1 // pred_check
      _
    $region15: #{tpu_custom_call.1} parent=1 // pred_check_branch
      %50 = sbr.rel (0) target = $region17
    $region16: #{tpu_custom_call.1} parent=1 // pred_region
      %51 = dma.done [#allocation6], 256
    $region17: #{tpu_custom_call.1} parent=1 // pred_fallthru
      _
    %s52 = sadd.s32 0, 0
    %p53 = scmp.lt.s32.totalorder %s52, 0
    %s54 = scalar_select %p53, %s52, 0
    %s55 = smul.u32 2, %s54
    %s56 = sadd.s32 0, 0
    %p57 = scmp.lt.s32.totalorder %s56, 0
    %s58 = scalar_select %p57, %s56, 0
    %s59 = smul.u32 2, %s58
    %p60 = scmp.eq.s32.totalorder 0, 0
    // Predicated region
    $region18: #{tpu_custom_call.1} parent=1 // pred_check
      %p61 = pneg %p60
    $region19: #{tpu_custom_call.1} parent=1 // pred_check_branch
      %63 = sbr.rel (%p61) target = $region21
    $region20: #{tpu_custom_call.1} parent=1 // pred_region
      %64 = vst [vmem:[#allocation7] sm:$0xff] 0.0
    $region21: #{tpu_custom_call.1} parent=1 // pred_fallthru
      _
    %v65 = vld [vmem:[#allocation2] sm:$0xff]
    %v66 = vld [vmem:[#allocation2 + $0x8] sm:$0xff]
    %v67 = vld [vmem:[#allocation5] sm:$0xff]
    %v68 = vld [vmem:[#allocation5 + $0x8] sm:$0xff]
    %v69 = vsub.f32 %v65, %v67
    %v70 = vsub.f32 %v66, %v68
    %v71 = vmul.f32 %v69, %v69
    %v72 = vmul.f32 %v70, %v70
    %v73 = vadd.f32 %v71, 1e-06
    %v74 = vadd.f32 %v72, 1e-06
    %v75 = vrsqrt.pop %v73
    %v76 = vmul.f32 %v73, %v75
    %vm77 = vcmp.eq.f32.partialorder %v73, inf
    %v78 = vsel %vm77, %v73, %v76
    %vm79 = vcmp.eq.f32.partialorder %v73, 0.0
    %v80 = vand.u32 %v73, 2147483648
    %v81 = vsel %vm79, %v80, %v78
    %v82 = vrsqrt.pop %v74
    %v83 = vmul.f32 %v74, %v82
    %vm84 = vcmp.eq.f32.partialorder %v74, inf
    %v85 = vsel %vm84, %v74, %v83
    %vm86 = vcmp.eq.f32.partialorder %v74, 0.0
    %v87 = vand.u32 %v74, 2147483648
    %v88 = vsel %vm86, %v87, %v85
    %v89 = vld [vmem:[#allocation7] sm:$0xff]
    %v90 = vadd.f32 %v81, %v88
    %v91 = vadd.f32 %v89, %v90
    %92 = vst [vmem:[#allocation7] sm:$0xff] %v91
    // Predicated region
    $region22: #{tpu_custom_call.1} parent=1 // pred_check
      _
    $region23: #{tpu_custom_call.1} parent=1 // pred_check_branch
      %94 = sbr.rel (0) target = $region25
    $region24: #{tpu_custom_call.1} parent=1 // pred_region
      %s96 = ssub.s32 128, 128
      %97 = vsyncadd [#allocation4], %s96
      %s99 = sshll.u32 [#allocation7], 4
      %s100 = int_to_ptr.vmem [resolvable:$true] %s99
      %102 = dma.vmem_to_hbm [thread:$0]  %s100, 128, %s2, [#allocation4]
    $region25: #{tpu_custom_call.1} parent=1 // pred_fallthru
      _
    // Predicated region
    $region26: #{tpu_custom_call.1} parent=1 // pred_check
      _
    $region27: #{tpu_custom_call.1} parent=1 // pred_check_branch
      %104 = sbr.rel (0) target = $region29
    $region28: #{tpu_custom_call.1} parent=1 // pred_region
      %105 = dma.done [#allocation4], 128
    $region29: #{tpu_custom_call.1} parent=1 // pred_fallthru
      _
    %106 = vsyncpa [#allocation3], 1
    %107 = vsyncpa [#allocation6], 1
    %108 = vsyncpa [#allocation4], 1

</llo_original>
